<compile_context>
chip_gen: v7x
topology: tpu7x:2x2x1
jax: 0.10.0
libtpu: 0.0.40
codegen_flags: <defaults>
</compile_context>

<pallas_src>
import functools

import jax
import jax.numpy as jnp
import numpy as np
from jax import lax
from jax.experimental import pallas as pl
from jax.experimental.pallas import tpu as pltpu

EPS = 1e-09
_LANE = 128


def _round_up(x, m):
    return ((x + m - 1) // m) * m


def _sublane_align(itemsize):
    # vreg sublane packing: 8 rows for 4-byte, 16 for 2-byte, 32 for 1-byte.
    return {4: 8, 2: 16, 1: 32}.get(int(itemsize), 8)


def _default_target_block_bytes():
    """Per-input, per-grid-step block byte target, by HBM-bandwidth class."""
    try:
        vmem = int(pltpu.get_tpu_info().vmem_capacity_bytes)
    except Exception:
        vmem = 128 * 1024 * 1024
    if vmem <= 64 * 1024 * 1024:
        # v7x: ~3.2 TB/s HBM, so the fixed ~0.35us/step overhead costs ~1 MiB
        # of transfer -> use ~4 MiB blocks.  2 inputs x 2 buffers x 4 MiB =
        # 16 MiB, comfortably inside the 64 MiB per-TC VMEM.
        return 4 * 1024 * 1024
    # v5e/v6e (128 MiB VMEM): 1-2 MiB blocks already reach >=85-90% of the
    # HBM roofline; bigger blocks only grow pipeline fill/drain.
    return 2 * 1024 * 1024


def _choose_row_split(rows, t, sub):
    """Smallest S with rows*S >= 2*sub and t % S == 0 (pseudo-row split)."""
    if rows <= 0 or t <= 0:
        return 1
    min_s = -(-(2 * sub) // rows)  # ceil(2*sub / rows)
    if min_s <= 1:
        return 1
    for s in range(min_s, min(min_s * 8, t) + 1):
        if t % s == 0:
            return s
    return 1


def _auto_blocks(rows_p, t_p, itemsize, sub, target_bytes, want_two_row_tiles):
    """Pick (block_rows, block_t) so each input block is ~target_bytes."""
    rows8 = _round_up(max(rows_p, 1), sub)
    if want_two_row_tiles and rows8 >= 2 * sub:
        # Cap the row tile so the "parallel" axis has >= 2 tiles (megacore).
        max_block_rows = _round_up(max(rows8 // 2, sub), sub)
    else:
        max_block_rows = rows8

    full_row_bytes = max(t_p * itemsize, 1)
    rows_for_full = (target_bytes // full_row_bytes) // sub * sub
    if rows_for_full >= sub:
        # Whole rows fit the byte target: take block_t == T (long contiguous
        # DMA runs) and spend the rest of the budget on rows.
        return int(min(max_block_rows, rows_for_full)), int(t_p)
    # Even `sub` whole rows exceed the target: chunk T into 128-aligned blocks,
    # keeping per-row runs as long as the budget allows.
    block_rows = int(min(max_block_rows, sub))
    bt = (target_bytes // (block_rows * itemsize)) // _LANE * _LANE
    bt = max(_LANE, int(bt))
    if bt >= t_p:
        bt = int(t_p)
    return block_rows, bt


def _cos_sdr_kernel(pred_ref, tgt_ref, num_ref, tt_ref, oo_ref, *,
                    total_t, block_t, mask_tail_t):
    """Grid = (row_tiles, t_tiles); t (reduction) axis is last / sequential."""
    k = pl.program_id(1)

    @pl.when(k == 0)
    def _init():
        num_ref[...] = jnp.zeros_like(num_ref)
        tt_ref[...] = jnp.zeros_like(tt_ref)
        oo_ref[...] = jnp.zeros_like(oo_ref)

    p = pred_ref[...].astype(jnp.float32)
    t = tgt_ref[...].astype(jnp.float32)

    def _accumulate(pv, tv):
        num_ref[...] += jnp.sum(tv * pv, axis=-1, keepdims=True)
        tt_ref[...] += jnp.sum(tv * tv, axis=-1, keepdims=True)
        oo_ref[...] += jnp.sum(pv * pv, axis=-1, keepdims=True)

    if mask_tail_t:  # trace-time flag: only emitted when T % block_t != 0
        last = pl.num_programs(1) - 1

        @pl.when(k != last)
        def _full():
            _accumulate(p, t)

        @pl.when(k == last)
        def _tail():
            n_valid = total_t - k * block_t
            col = lax.broadcasted_iota(jnp.int32, p.shape, 1)
            valid = col < n_valid
            zero = jnp.zeros_like(p)
            _accumulate(jnp.where(valid, p, zero), jnp.where(valid, t, zero))
    else:
        _accumulate(p, t)


def cos_sdr_loss_segment(output, target, *, block_rows=None, block_t=None,
                         target_block_bytes=None, allow_row_split=True,
                         out_dict=True):
    """Matches CosSDRLossSegment.forward with reduction=torch.mean."""
    assert output.shape == target.shape, "output/target shape mismatch"
    T = int(output.shape[-1])
    rows = int(np.prod(output.shape[:-1])) if output.ndim > 1 else 1
    itemsize = int(np.dtype(output.dtype).itemsize)
    sub = _sublane_align(itemsize)

    if target_block_bytes is None:
        target_block_bytes = _default_target_block_bytes()

    # ---- Pseudo-row split (rows, T) -> (rows*S, T/S) so the parallel row
    # axis has >= 2 tiles even for tiny batches (v7x megacore). Exact: per-row
    # sums are recomposed in the wrapper.
    split = 1
    if allow_row_split and block_rows is None and _round_up(rows, sub) < 2 * sub:
        split = _choose_row_split(rows, T, sub)
    rows_p = rows * split
    t_p = T // split

    # Keep the storage dtype (no wrapper upcast); reshape is free (contiguous).
    pred2 = output.reshape(rows_p, t_p)
    tgt2 = target.reshape(rows_p, t_p)

    # ---- Block sizing (bytes-driven) -------------------------------------
    auto_br, auto_bt = _auto_blocks(rows_p, t_p, itemsize, sub,
                                    int(target_block_bytes),
                                    want_two_row_tiles=allow_row_split)
    if block_rows is None:
        block_rows = auto_br
    else:
        block_rows = int(min(_round_up(int(block_rows), sub),
                             _round_up(max(rows_p, 1), sub)))
    if block_t is None:
        block_t = auto_bt
    else:
        block_t = int(min(int(block_t), t_p))
    if block_t != t_p:
        assert block_t % _LANE == 0, "block_t must be a multiple of 128 (or == T)"

    n_rows = pl.cdiv(rows_p, block_rows)
    n_t = pl.cdiv(t_p, block_t)
    mask_tail_t = (t_p % block_t) != 0

    # ---- VMEM limit: 2 inputs x 2 pipeline buffers + 3 tiny outputs --------
    block_bytes = block_rows * block_t * itemsize
    needed = 2 * 2 * block_bytes + 3 * 2 * block_rows * 4
    vmem_limit_bytes = int(min(max(needed + 12 * 2**20, 24 * 2**20), 48 * 2**20))

    kernel = functools.partial(_cos_sdr_kernel, total_t=t_p, block_t=block_t,
                               mask_tail_t=mask_tail_t)

    out_struct = jax.ShapeDtypeStruct((rows_p, 1), jnp.float32)
    out_spec = pl.BlockSpec((block_rows, 1), lambda i, k: (i, 0))

    num_p, tt_p, oo_p = pl.pallas_call(
        kernel,
        out_shape=(out_struct, out_struct, out_struct),
        grid_spec=pltpu.PrefetchScalarGridSpec(
            num_scalar_prefetch=0,
            grid=(n_rows, n_t),  # reduction axis last
            in_specs=[
                pl.BlockSpec((block_rows, block_t), lambda i, k: (i, k)),
                pl.BlockSpec((block_rows, block_t), lambda i, k: (i, k)),
            ],
            out_specs=(out_spec, out_spec, out_spec),
        ),
        compiler_params=pltpu.CompilerParams(
            # Row tiles are independent -> shard across TensorCores on v7x;
            # T chunks accumulate into the resident output block -> sequential.
            dimension_semantics=("parallel", "arbitrary"),
            vmem_limit_bytes=vmem_limit_bytes,
        ),
        cost_estimate=pl.CostEstimate(
            flops=int(6 * rows_p * t_p),
            transcendentals=0,
            bytes_accessed=int(2 * rows_p * t_p * itemsize + 3 * rows_p * 4),
        ),
    )(pred2, tgt2)

    # ---- Tiny finalize in the wrapper (exact reference math) --------------
    num = num_p.reshape(rows, split).sum(axis=1)
    tt = tt_p.reshape(rows, split).sum(axis=1)
    oo = oo_p.reshape(rows, split).sum(axis=1)
    den = jnp.sqrt(tt) * jnp.sqrt(oo)          # == ||t|| * ||o||
    loss_per_element = -num / (den + jnp.float32(EPS))
    loss = jnp.mean(loss_per_element)
    return {"CosSDRLossSegment": loss} if out_dict else loss


def _reference(output, target):
    o = output.astype(jnp.float32)
    t = target.astype(jnp.float32)
    num = jnp.sum(t * o, axis=-1)
    den = jnp.linalg.norm(t, axis=-1) * jnp.linalg.norm(o, axis=-1)
    return jnp.mean(-num / (den + EPS))


if __name__ == "__main__":
    key = jax.random.PRNGKey(0)
    k1, k2, k3, k4, k5, k6 = jax.random.split(key, 6)

    # Test 1: small shape consistent with the module (batch=2, channels=4, seq=16).
    out_a = jax.random.normal(k1, (2, 4, 16), dtype=jnp.float32)
    tgt_a = jax.random.normal(k2, (2, 4, 16), dtype=jnp.float32)
    loss_a = jax.block_until_ready(
        cos_sdr_loss_segment(out_a, tgt_a)["CosSDRLossSegment"])
    np.testing.assert_allclose(np.asarray(loss_a), np.asarray(_reference(out_a, tgt_a)),
                               rtol=1e-5, atol=1e-5)

    # Test 2: exercises the T-chunk grid axis + tail-column masking
    # (T=300, pseudo-split -> T'=150, block_t=128 -> 2 chunks, last partial).
    out_b = jax.random.normal(k3, (2, 4, 300), dtype=jnp.float32)
    tgt_b = jax.random.normal(k4, (2, 4, 300), dtype=jnp.float32)
    loss_b = jax.block_until_ready(
        cos_sdr_loss_segment(out_b, tgt_b, block_t=128)["CosSDRLossSegment"])
    np.testing.assert_allclose(np.asarray(loss_b), np.asarray(_reference(out_b, tgt_b)),
                               rtol=1e-5, atol=1e-5)

    # Test 3: row count not a multiple of the sublane alignment (padded row tile).
    out_c = jax.random.normal(k5, (3, 5, 160), dtype=jnp.float32)
    tgt_c = jax.random.normal(k6, (3, 5, 160), dtype=jnp.float32)
    loss_c = jax.block_until_ready(
        cos_sdr_loss_segment(out_c, tgt_c)["CosSDRLossSegment"])
    np.testing.assert_allclose(np.asarray(loss_c), np.asarray(_reference(out_c, tgt_c)),
                               rtol=1e-5, atol=1e-5)

    # Test 4: bf16 inputs exercise the dtype-aware (16-row) sublane alignment.
    out_d = out_b.astype(jnp.bfloat16)
    tgt_d = tgt_b.astype(jnp.bfloat16)
    loss_d = jax.block_until_ready(
        cos_sdr_loss_segment(out_d, tgt_d)["CosSDRLossSegment"])
    ref_d = _reference(out_d.astype(jnp.float32), tgt_d.astype(jnp.float32))
    np.testing.assert_allclose(np.asarray(loss_d), np.asarray(ref_d),
                               rtol=1e-3, atol=1e-3)

    print("KERNEL_OK")
</pallas_src>

<mosaic_0001>
module attributes {stable_mosaic.version = 11 : i64} {
  func.func @_cos_sdr_kernel(%arg0: i32, %arg1: i32, %arg2: memref<8x8xf32, #tpu.memory_space<vmem>>, %arg3: memref<8x8xf32, #tpu.memory_space<vmem>>, %arg4: memref<8x1xf32, #tpu.memory_space<vmem>>, %arg5: memref<8x1xf32, #tpu.memory_space<vmem>>, %arg6: memref<8x1xf32, #tpu.memory_space<vmem>>) attributes {dimension_semantics = [#tpu.dimension_semantics<parallel>, #tpu.dimension_semantics<arbitrary>], iteration_bounds = array<i64: 2, 1>, scalar_prefetch = 0 : i64, scratch_operands = 0 : i64, tpu.core_type = #tpu.core_type<tc>, window_params = [{transform_indices = @transform_0, window_bounds = array<i64: 8, 8>}, {transform_indices = @transform_1, window_bounds = array<i64: 8, 8>}, {transform_indices = @transform_2, window_bounds = array<i64: 8, 1>}, {transform_indices = @transform_3, window_bounds = array<i64: 8, 1>}, {transform_indices = @transform_4, window_bounds = array<i64: 8, 1>}]} {
    %c0_i32 = arith.constant 0 : i32
    %0 = arith.cmpi eq, %arg1, %c0_i32 : i32
    %1 = arith.extui %0 : i1 to i32
    %c0_i32_0 = arith.constant 0 : i32
    %2 = arith.cmpi ne, %1, %c0_i32_0 : i32
    scf.if %2 {
      %cst_18 = arith.constant 0.000000e+00 : f32
      %23 = vector.broadcast %cst_18 : f32 to vector<8x1xf32>
      %c0_19 = arith.constant 0 : index
      %c0_20 = arith.constant 0 : index
      %24 = vector.load %arg4[%c0_19, %c0_20] : memref<8x1xf32, #tpu.memory_space<vmem>>, vector<8x1xf32>
      tpu.vector_store %arg4[%c0_19, %c0_20], %23 {strides = array<i32>} : memref<8x1xf32, #tpu.memory_space<vmem>>, vector<8x1xf32>,
      %cst_21 = arith.constant 0.000000e+00 : f32
      %25 = vector.broadcast %cst_21 : f32 to vector<8x1xf32>
      %c0_22 = arith.constant 0 : index
      %c0_23 = arith.constant 0 : index
      %26 = vector.load %arg5[%c0_22, %c0_23] : memref<8x1xf32, #tpu.memory_space<vmem>>, vector<8x1xf32>
      tpu.vector_store %arg5[%c0_22, %c0_23], %25 {strides = array<i32>} : memref<8x1xf32, #tpu.memory_space<vmem>>, vector<8x1xf32>,
      %cst_24 = arith.constant 0.000000e+00 : f32
      %27 = vector.broadcast %cst_24 : f32 to vector<8x1xf32>
      %c0_25 = arith.constant 0 : index
      %c0_26 = arith.constant 0 : index
      %28 = vector.load %arg6[%c0_25, %c0_26] : memref<8x1xf32, #tpu.memory_space<vmem>>, vector<8x1xf32>
      tpu.vector_store %arg6[%c0_25, %c0_26], %27 {strides = array<i32>} : memref<8x1xf32, #tpu.memory_space<vmem>>, vector<8x1xf32>,
    } else {
    }
    %c0 = arith.constant 0 : index
    %c0_1 = arith.constant 0 : index
    %3 = vector.load %arg2[%c0, %c0_1] : memref<8x8xf32, #tpu.memory_space<vmem>>, vector<8x8xf32>
    %c0_2 = arith.constant 0 : index
    %c0_3 = arith.constant 0 : index
    %4 = vector.load %arg3[%c0_2, %c0_3] : memref<8x8xf32, #tpu.memory_space<vmem>>, vector<8x8xf32>
    %c0_4 = arith.constant 0 : index
    %c0_5 = arith.constant 0 : index
    %5 = vector.load %arg4[%c0_4, %c0_5] : memref<8x1xf32, #tpu.memory_space<vmem>>, vector<8x1xf32>
    %6 = arith.mulf %4, %3 : vector<8x8xf32>
    %cst = arith.constant dense<0.000000e+00> : vector<8xf32>
    %7 = vector.multi_reduction <add>, %6, %cst [1] : vector<8x8xf32> to vector<8xf32>
    %8 = vector.shape_cast %7 : vector<8xf32> to vector<8x1xf32>
    %9 = arith.addf %5, %8 : vector<8x1xf32>
    %c0_6 = arith.constant 0 : index
    %c0_7 = arith.constant 0 : index
    %10 = vector.load %arg4[%c0_6, %c0_7] : memref<8x1xf32, #tpu.memory_space<vmem>>, vector<8x1xf32>
    tpu.vector_store %arg4[%c0_6, %c0_7], %9 {strides = array<i32>} : memref<8x1xf32, #tpu.memory_space<vmem>>, vector<8x1xf32>,
    %c0_8 = arith.constant 0 : index
    %c0_9 = arith.constant 0 : index
    %11 = vector.load %arg5[%c0_8, %c0_9] : memref<8x1xf32, #tpu.memory_space<vmem>>, vector<8x1xf32>
    %12 = arith.mulf %4, %4 : vector<8x8xf32>
    %cst_10 = arith.constant dense<0.000000e+00> : vector<8xf32>
    %13 = vector.multi_reduction <add>, %12, %cst_10 [1] : vector<8x8xf32> to vector<8xf32>
    %14 = vector.shape_cast %13 : vector<8xf32> to vector<8x1xf32>
    %15 = arith.addf %11, %14 : vector<8x1xf32>
    %c0_11 = arith.constant 0 : index
    %c0_12 = arith.constant 0 : index
    %16 = vector.load %arg5[%c0_11, %c0_12] : memref<8x1xf32, #tpu.memory_space<vmem>>, vector<8x1xf32>
    tpu.vector_store %arg5[%c0_11, %c0_12], %15 {strides = array<i32>} : memref<8x1xf32, #tpu.memory_space<vmem>>, vector<8x1xf32>,
    %c0_13 = arith.constant 0 : index
    %c0_14 = arith.constant 0 : index
    %17 = vector.load %arg6[%c0_13, %c0_14] : memref<8x1xf32, #tpu.memory_space<vmem>>, vector<8x1xf32>
    %18 = arith.mulf %3, %3 : vector<8x8xf32>
    %cst_15 = arith.constant dense<0.000000e+00> : vector<8xf32>
    %19 = vector.multi_reduction <add>, %18, %cst_15 [1] : vector<8x8xf32> to vector<8xf32>
    %20 = vector.shape_cast %19 : vector<8xf32> to vector<8x1xf32>
    %21 = arith.addf %17, %20 : vector<8x1xf32>
    %c0_16 = arith.constant 0 : index
    %c0_17 = arith.constant 0 : index
    %22 = vector.load %arg6[%c0_16, %c0_17] : memref<8x1xf32, #tpu.memory_space<vmem>>, vector<8x1xf32>
    tpu.vector_store %arg6[%c0_16, %c0_17], %21 {strides = array<i32>} : memref<8x1xf32, #tpu.memory_space<vmem>>, vector<8x1xf32>,
    return
  }
  func.func @transform_0(%arg0: i32, %arg1: i32) -> (i32, i32) {
    %c0_i32 = arith.constant 0 : i32
    return %arg0, %arg1 : i32, i32
  }
  func.func @transform_1(%arg0: i32, %arg1: i32) -> (i32, i32) {
    %c0_i32 = arith.constant 0 : i32
    return %arg0, %arg1 : i32, i32
  }
  func.func @transform_2(%arg0: i32, %arg1: i32) -> (i32, i32) {
    %c0_i32 = arith.constant 0 : i32
    %c0_i32_0 = arith.constant 0 : i32
    return %arg0, %c0_i32 : i32, i32
  }
  func.func @transform_3(%arg0: i32, %arg1: i32) -> (i32, i32) {
    %c0_i32 = arith.constant 0 : i32
    %c0_i32_0 = arith.constant 0 : i32
    return %arg0, %c0_i32 : i32, i32
  }
  func.func @transform_4(%arg0: i32, %arg1: i32) -> (i32, i32) {
    %c0_i32 = arith.constant 0 : i32
    %c0_i32_0 = arith.constant 0 : i32
    return %arg0, %c0_i32 : i32, i32
  }
}

</mosaic_0001>

<llo_original>
// kernel: tpu_custom_call.1
$region0: #{tpu_custom_call.1}
  #allocation0 [shape = 'u32[]', space=smem, size = 0x4, offset = 0x4, fixed_abs, tag = 'smem constant byte address 0x4 - core index']
  #allocation1 [shape = 'u32[144,128]{1,0:T(1,128)}', space=vmem, size = 0x12000, scoped, tag = 'internal scratch']
  %s0 = inlined_call_operand.vmem [shape: f32[16,8], index: 0, kind: input, shape index: {}]
  %s1 = inlined_call_operand.vmem [shape: f32[16,8], index: 1, kind: input, shape index: {}]
  %s2 = inlined_call_operand.vmem [shape: f32[16,1], index: 2, kind: output, shape index: {0}]
  %s3 = inlined_call_operand.vmem [shape: f32[16,1], index: 3, kind: output, shape index: {1}]
  %s4 = inlined_call_operand.vmem [shape: f32[16,1], index: 4, kind: output, shape index: {2}]
  %5 = xla_tuple %s2, %s3, %s4
  %s6 = sld [smem:[#allocation0]]
  $region61: #{tpu_custom_call.1} parent=0
    _
  %s8 = ssub.s32 1, %s6
  %s9 = scalar_select 0, %s8, %s6
  loop: start=0, step=1, limit=4
  $region2: #{tpu_custom_call.1} parent=0 // loop_pre_header
    _
  $region3: #{tpu_custom_call.1} parent=0 // loop_header
    %s11 = sphi 0, %s15
    %p12 = scmp.ge.s32.totalorder %s11, 4
    %s18 = sphi 0, %s30
    %s19 = sphi 0, %s26
    %s20 = sphi 0, %s18
    %s21 = sphi 0, %s19
    %s22 = sphi 0, %s20
    %s23 = sphi 0, %s21
    %s35 = sphi 0, %s37
    %s38 = sphi 0, %s35
    %s39 = sphi 0, %s38
    %s55 = sphi 0, %s39
    %s63 = sphi 0, %s65
    %s66 = sphi 0, %s63
    %s67 = sphi 0, %s66
    %s83 = sphi 0, %s67
    %s89 = sphi 0, %s91
    %s92 = sphi 0, %s89
    %s93 = sphi 0, %s92
    %s109 = sphi 0, %s93
    %s115 = sphi 0, %s117
    %s118 = sphi 0, %s115
    %s119 = sphi 0, %s118
    %s135 = sphi 0, %s119
    %s141 = sphi 0, %s143
    %s144 = sphi 0, %s141
    %s145 = sphi 0, %s144
    %s161 = sphi 0, %s145
  $region4: #{tpu_custom_call.1} parent=0 // loop_header_branch
    %14 = sbr.rel (%p12) target = $region8
  $region5: #{tpu_custom_call.1} parent=0 // loop_body
    %s16 = ssub.s32 %s11, 1
    %s17 = ssub.s32 %s11, 2
    %s24 = sadd.s32 1, %s19
    %p25 = scmp.ge.s32.totalorder %s24, 1
    %s26 = scalar_select %p25, 0, %s24
    %s27 = sadd.s32 1, %s18
    %s28 = scalar_select %p25, %s27, %s18
    %p29 = scmp.ge.s32.totalorder %s28, 2
    %s30 = scalar_select %p29, 0, %s28
    %s31 = ssub.s32 %s18, %s30
    %s32 = ssub.s32 %s19, %s26
    %s33 = sor.u32 %s31, %s32
    %p34 = scmp.eq.s32.totalorder %s33, 0
    %s36 = sadd.s32 %s35, 1
    %s37 = scalar_select %p34, %s35, %s36
    %p40 = pneg %p34
    %p41 = scmp.eq.s32.totalorder %s11, 1
    %p42 = por %p40, %p41
    %p43 = scmp.ne.s32.totalorder %s35, %s38
    %p44 = scmp.eq.s32.totalorder %s11, 0
    %p45 = por %p43, %p44
    %p46 = scmp.ne.s32.totalorder %s35, %s38
    %p47 = scmp.eq.s32.totalorder %s16, 1
    %p48 = por %p46, %p47
    %p49 = scmp.ne.s32.totalorder %s38, %s39
    %p50 = scmp.eq.s32.totalorder %s16, 0
    %p51 = por %p49, %p50
    %p52 = scmp.ne.s32.totalorder %s38, %s39
    %p53 = scmp.eq.s32.totalorder %s17, 1
    %p54 = por %p52, %p53
    %p56 = scmp.ne.s32.totalorder %s39, %s55
    %p57 = scmp.eq.s32.totalorder %s17, 0
    %p58 = por %p56, %p57
    %s59 = ssub.s32 %s18, %s30
    %s60 = ssub.s32 %s19, %s26
    %s61 = sor.u32 %s59, %s60
    %p62 = scmp.eq.s32.totalorder %s61, 0
    %s64 = sadd.s32 %s63, 1
    %s65 = scalar_select %p62, %s63, %s64
    %p68 = pneg %p62
    %p69 = scmp.eq.s32.totalorder %s11, 1
    %p70 = por %p68, %p69
    %p71 = scmp.ne.s32.totalorder %s63, %s66
    %p72 = scmp.eq.s32.totalorder %s11, 0
    %p73 = por %p71, %p72
    %p74 = scmp.ne.s32.totalorder %s63, %s66
    %p75 = scmp.eq.s32.totalorder %s16, 1
    %p76 = por %p74, %p75
    %p77 = scmp.ne.s32.totalorder %s66, %s67
    %p78 = scmp.eq.s32.totalorder %s16, 0
    %p79 = por %p77, %p78
    %p80 = scmp.ne.s32.totalorder %s66, %s67
    %p81 = scmp.eq.s32.totalorder %s17, 1
    %p82 = por %p80, %p81
    %p84 = scmp.ne.s32.totalorder %s67, %s83
    %p85 = scmp.eq.s32.totalorder %s17, 0
    %p86 = por %p84, %p85
    %s87 = ssub.s32 %s18, %s30
    %p88 = scmp.eq.s32.totalorder %s87, 0
    %s90 = sadd.s32 %s89, 1
    %s91 = scalar_select %p88, %s89, %s90
    %p94 = pneg %p88
    %p95 = scmp.eq.s32.totalorder %s11, 1
    %p96 = por %p94, %p95
    %p97 = scmp.ne.s32.totalorder %s89, %s92
    %p98 = scmp.eq.s32.totalorder %s11, 0
    %p99 = por %p97, %p98
    %p100 = scmp.ne.s32.totalorder %s89, %s92
    %p101 = scmp.eq.s32.totalorder %s16, 1
    %p102 = por %p100, %p101
    %p103 = scmp.ne.s32.totalorder %s92, %s93
    %p104 = scmp.eq.s32.totalorder %s16, 0
    %p105 = por %p103, %p104
    %p106 = scmp.ne.s32.totalorder %s92, %s93
    %p107 = scmp.eq.s32.totalorder %s17, 1
    %p108 = por %p106, %p107
    %p110 = scmp.ne.s32.totalorder %s93, %s109
    %p111 = scmp.eq.s32.totalorder %s17, 0
    %p112 = por %p110, %p111
    %s113 = ssub.s32 %s18, %s30
    %p114 = scmp.eq.s32.totalorder %s113, 0
    %s116 = sadd.s32 %s115, 1
    %s117 = scalar_select %p114, %s115, %s116
    %p120 = pneg %p114
    %p121 = scmp.eq.s32.totalorder %s11, 1
    %p122 = por %p120, %p121
    %p123 = scmp.ne.s32.totalorder %s115, %s118
    %p124 = scmp.eq.s32.totalorder %s11, 0
    %p125 = por %p123, %p124
    %p126 = scmp.ne.s32.totalorder %s115, %s118
    %p127 = scmp.eq.s32.totalorder %s16, 1
    %p128 = por %p126, %p127
    %p129 = scmp.ne.s32.totalorder %s118, %s119
    %p130 = scmp.eq.s32.totalorder %s16, 0
    %p131 = por %p129, %p130
    %p132 = scmp.ne.s32.totalorder %s118, %s119
    %p133 = scmp.eq.s32.totalorder %s17, 1
    %p134 = por %p132, %p133
    %p136 = scmp.ne.s32.totalorder %s119, %s135
    %p137 = scmp.eq.s32.totalorder %s17, 0
    %p138 = por %p136, %p137
    %s139 = ssub.s32 %s18, %s30
    %p140 = scmp.eq.s32.totalorder %s139, 0
    %s142 = sadd.s32 %s141, 1
    %s143 = scalar_select %p140, %s141, %s142
    %p146 = pneg %p140
    %p147 = scmp.eq.s32.totalorder %s11, 1
    %p148 = por %p146, %p147
    %p149 = scmp.ne.s32.totalorder %s141, %s144
    %p150 = scmp.eq.s32.totalorder %s11, 0
    %p151 = por %p149, %p150
    %p152 = scmp.ne.s32.totalorder %s141, %s144
    %p153 = scmp.eq.s32.totalorder %s16, 1
    %p154 = por %p152, %p153
    %p155 = scmp.ne.s32.totalorder %s144, %s145
    %p156 = scmp.eq.s32.totalorder %s16, 0
    %p157 = por %p155, %p156
    %p158 = scmp.ne.s32.totalorder %s144, %s145
    %p159 = scmp.eq.s32.totalorder %s17, 1
    %p160 = por %p158, %p159
    %p162 = scmp.ne.s32.totalorder %s145, %s161
    %p163 = scmp.eq.s32.totalorder %s17, 0
    %p164 = por %p162, %p163
    %p165 = scmp.le.s32.totalorder 1, %s11
    %p166 = scmp.lt.s32.totalorder %s11, 3
    %p167 = pnand %p165, %p166
    %p168 = pneg %p167
    // Predicated region
    $region9: #{tpu_custom_call.1} parent=5 // pred_check
      _
    $region10: #{tpu_custom_call.1} parent=5 // pred_check_branch
      %170 = sbr.rel (%p167) target = $region12
    $region11: #{tpu_custom_call.1} parent=5 // pred_region
      %s171 = ssub.s32 %s11, 1
    $region12: #{tpu_custom_call.1} parent=5 // pred_fallthru
      _
    %p172 = scmp.lt.s32.totalorder %s11, 2
    // Predicated region
    $region13: #{tpu_custom_call.1} parent=5 // pred_check
      %p173 = pneg %p172
    $region14: #{tpu_custom_call.1} parent=5 // pred_check_branch
      %175 = sbr.rel (%p173) target = $region16
    $region15: #{tpu_custom_call.1} parent=5 // pred_region
      // Predicated region
      $region17: #{tpu_custom_call.1} parent=15 // pred_check
        %p176 = pneg %p45
      $region18: #{tpu_custom_call.1} parent=15 // pred_check_branch
        %178 = sbr.rel (%p176) target = $region20
      $region19: #{tpu_custom_call.1} parent=15 // pred_region
        %p179 = scmp.lt.s32.totalorder %s18, 1
        %s180 = scalar_select %p179, %s18, 1
        %p181 = scmp.lt.s32.totalorder %s19, 0
        %s182 = scalar_select %p181, %s19, 0
        %s183 = sadd.s32 %s182, %s180
        %s184 = smul.addr %s183, 8
        %s185 = scalar_lea.vmem %s0, %s184
      $region20: #{tpu_custom_call.1} parent=15 // pred_fallthru
        _
      // Predicated region
      $region21: #{tpu_custom_call.1} parent=15 // pred_check
        %p186 = pneg %p73
      $region22: #{tpu_custom_call.1} parent=15 // pred_check_branch
        %188 = sbr.rel (%p186) target = $region24
      $region23: #{tpu_custom_call.1} parent=15 // pred_region
        %p189 = scmp.lt.s32.totalorder %s18, 1
        %s190 = scalar_select %p189, %s18, 1
        %p191 = scmp.lt.s32.totalorder %s19, 0
        %s192 = scalar_select %p191, %s19, 0
        %s193 = sadd.s32 %s192, %s190
        %s194 = smul.addr %s193, 8
        %s195 = scalar_lea.vmem %s1, %s194
      $region24: #{tpu_custom_call.1} parent=15 // pred_fallthru
        _
    $region16: #{tpu_custom_call.1} parent=5 // pred_fallthru
      _
    %p196 = scmp.le.s32.totalorder 1, %s11
    %p197 = scmp.lt.s32.totalorder %s11, 3
    %p198 = pnand %p196, %p197
    %p199 = pneg %p198
    // Predicated region
    $region25: #{tpu_custom_call.1} parent=5 // pred_check
      _
    $region26: #{tpu_custom_call.1} parent=5 // pred_check_branch
      %201 = sbr.rel (%p198) target = $region28
    $region27: #{tpu_custom_call.1} parent=5 // pred_region
      %s202 = ssub.s32 %s11, 1
      %p203 = scmp.lt.s32.totalorder %s20, 1
      %s204 = scalar_select %p203, %s20, 1
      %p205 = scmp.lt.s32.totalorder %s21, 0
      %s206 = scalar_select %p205, %s21, 0
      %s207 = sadd.s32 %s206, %s204
      %s208 = smul.addr %s207, 8
      %s209 = scalar_lea.vmem %s0, %s208
      %p210 = pneg %p51
      %p211 = pneg %p48
      %p212 = scmp.lt.s32.totalorder %s20, 1
      %s213 = scalar_select %p212, %s20, 1
      %p214 = scmp.lt.s32.totalorder %s21, 0
      %s215 = scalar_select %p214, %s21, 0
      %s216 = sadd.s32 %s215, %s213
      %s217 = smul.addr %s216, 8
      %s218 = scalar_lea.vmem %s1, %s217
      %p219 = pneg %p79
      %p220 = pneg %p76
      %p221 = pneg %p105
      %p222 = pneg %p102
      %p223 = scmp.lt.s32.totalorder %s20, 1
      %s224 = scalar_select %p223, %s20, 1
      %s225 = smul.addr %s224, 8
      %s226 = scalar_lea.vmem %s2, %s225
      %p227 = pneg %p131
      %p228 = pneg %p128
      %p229 = scmp.lt.s32.totalorder %s20, 1
      %s230 = scalar_select %p229, %s20, 1
      %s231 = smul.addr %s230, 8
      %s232 = scalar_lea.vmem %s3, %s231
      %p233 = pneg %p157
      %p234 = pneg %p154
      %p235 = scmp.lt.s32.totalorder %s20, 1
      %s236 = scalar_select %p235, %s20, 1
      %s237 = smul.addr %s236, 8
      %s238 = scalar_lea.vmem %s4, %s237
      %p239 = scmp.lt.s32.totalorder %s20, 1
      %s240 = scalar_select %p239, %s20, 1
      %p241 = scmp.lt.s32.totalorder %s21, 0
      %s242 = scalar_select %p241, %s21, 0
      %s243 = sadd.s32 %s242, %s240
      %s244 = smul.addr %s243, 8
      %s245 = scalar_lea.vmem %s0, %s244
      %p246 = scmp.lt.s32.totalorder %s20, 1
      %s247 = scalar_select %p246, %s20, 1
      %p248 = scmp.lt.s32.totalorder %s21, 0
      %s249 = scalar_select %p248, %s21, 0
      %s250 = sadd.s32 %s249, %s247
      %s251 = smul.addr %s250, 8
      %s252 = scalar_lea.vmem %s1, %s251
      %p253 = scmp.lt.s32.totalorder %s20, 1
      %s254 = scalar_select %p253, %s20, 1
      %s255 = smul.addr %s254, 8
      %s256 = scalar_lea.vmem %s2, %s255
      %p257 = scmp.lt.s32.totalorder %s20, 1
      %s258 = scalar_select %p257, %s20, 1
      %s259 = smul.addr %s258, 8
      %s260 = scalar_lea.vmem %s3, %s259
      %p261 = scmp.lt.s32.totalorder %s20, 1
      %s262 = scalar_select %p261, %s20, 1
      %s263 = smul.addr %s262, 8
      %s264 = scalar_lea.vmem %s4, %s263
      %p265 = scmp.eq.s32.totalorder %s21, 0
      // Predicated region
      $region29: #{tpu_custom_call.1} parent=27 // pred_check
        %p266 = pneg %p265
      $region30: #{tpu_custom_call.1} parent=27 // pred_check_branch
        %268 = sbr.rel (%p266) target = $region32
      $region31: #{tpu_custom_call.1} parent=27 // pred_region
        %vm269 = vcmask 7168
        %270 = vst.msk [vmem:[%s256] sm:$0xff] %vm269, 0.0
        %271 = vst.msk [vmem:[%s260] sm:$0xff] %vm269, 0.0
        %272 = vst.msk [vmem:[%s264] sm:$0xff] %vm269, 0.0
      $region32: #{tpu_custom_call.1} parent=27 // pred_fallthru
        _
      %v273 = vld [vmem:[%s245] sm:$0xff]
      %v274 = vld [vmem:[%s252] sm:$0xff]
      %v275 = vld [vmem:[%s256] sm:$0xff]
      %v276 = vmul.f32 %v274, %v273
      %vm277 = vcmask 64512
      %v278 = vsel %vm277, %v276, 0.0
      %279 = vadd.xlane.f32.xlu0 %v278
      %v280 = vpop.xlane.xlu0 %279
      %v281 = vadd.f32 %v275, %v280
      %vm282 = vcmask 7168
      %283 = vst.msk [vmem:[%s256] sm:$0xff] %vm282, %v281
      %v284 = vld [vmem:[%s260] sm:$0xff]
      %v285 = vmul.f32 %v274, %v274
      %v286 = vsel %vm277, %v285, 0.0
      %287 = vadd.xlane.f32.xlu0 %v286
      %v288 = vpop.xlane.xlu0 %287
      %v289 = vadd.f32 %v284, %v288
      %290 = vst.msk [vmem:[%s260] sm:$0xff] %vm282, %v289
      %v291 = vld [vmem:[%s264] sm:$0xff]
      %v292 = vmul.f32 %v273, %v273
      %v293 = vsel %vm277, %v292, 0.0
      %294 = vadd.xlane.f32.xlu0 %v293
      %v295 = vpop.xlane.xlu0 %294
      %v296 = vadd.f32 %v291, %v295
      %297 = vst.msk [vmem:[%s264] sm:$0xff] %vm282, %v296
      %p298 = scmp.lt.s32.totalorder %s20, 1
      %s299 = scalar_select %p298, %s20, 1
      %s300 = smul.addr %s299, 8
      %s301 = scalar_lea.vmem %s2, %s300
      %p302 = scmp.lt.s32.totalorder %s20, 1
      %s303 = scalar_select %p302, %s20, 1
      %s304 = smul.addr %s303, 8
      %s305 = scalar_lea.vmem %s3, %s304
      %p306 = scmp.lt.s32.totalorder %s20, 1
      %s307 = scalar_select %p306, %s20, 1
      %s308 = smul.addr %s307, 8
      %s309 = scalar_lea.vmem %s4, %s308
      // Predicated region
      $region33: #{tpu_custom_call.1} parent=27 // pred_check
        %p310 = pneg %p102
      $region34: #{tpu_custom_call.1} parent=27 // pred_check_branch
        %312 = sbr.rel (%p310) target = $region36
      $region35: #{tpu_custom_call.1} parent=27 // pred_region
        _
      $region36: #{tpu_custom_call.1} parent=27 // pred_fallthru
        _
      // Predicated region
      $region37: #{tpu_custom_call.1} parent=27 // pred_check
        %p313 = pneg %p128
      $region38: #{tpu_custom_call.1} parent=27 // pred_check_branch
        %315 = sbr.rel (%p313) target = $region40
      $region39: #{tpu_custom_call.1} parent=27 // pred_region
        _
      $region40: #{tpu_custom_call.1} parent=27 // pred_fallthru
        _
      // Predicated region
      $region41: #{tpu_custom_call.1} parent=27 // pred_check
        %p316 = pneg %p154
      $region42: #{tpu_custom_call.1} parent=27 // pred_check_branch
        %318 = sbr.rel (%p316) target = $region44
      $region43: #{tpu_custom_call.1} parent=27 // pred_region
        _
      $region44: #{tpu_custom_call.1} parent=27 // pred_fallthru
        _
    $region28: #{tpu_custom_call.1} parent=5 // pred_fallthru
      _
    %p319 = scmp.le.s32.totalorder 2, %s11
    // Predicated region
    $region45: #{tpu_custom_call.1} parent=5 // pred_check
      %p320 = pneg %p319
    $region46: #{tpu_custom_call.1} parent=5 // pred_check_branch
      %322 = sbr.rel (%p320) target = $region48
    $region47: #{tpu_custom_call.1} parent=5 // pred_region
      %s323 = ssub.s32 %s11, 2
      // Predicated region
      $region49: #{tpu_custom_call.1} parent=47 // pred_check
        %p324 = pneg %p108
      $region50: #{tpu_custom_call.1} parent=47 // pred_check_branch
        %326 = sbr.rel (%p324) target = $region52
      $region51: #{tpu_custom_call.1} parent=47 // pred_region
        %p327 = scmp.lt.s32.totalorder %s22, 1
        %s328 = scalar_select %p327, %s22, 1
        %s329 = smul.addr %s328, 8
        %s330 = scalar_lea.vmem %s2, %s329
      $region52: #{tpu_custom_call.1} parent=47 // pred_fallthru
        _
      // Predicated region
      $region53: #{tpu_custom_call.1} parent=47 // pred_check
        %p331 = pneg %p134
      $region54: #{tpu_custom_call.1} parent=47 // pred_check_branch
        %333 = sbr.rel (%p331) target = $region56
      $region55: #{tpu_custom_call.1} parent=47 // pred_region
        %p334 = scmp.lt.s32.totalorder %s22, 1
        %s335 = scalar_select %p334, %s22, 1
        %s336 = smul.addr %s335, 8
        %s337 = scalar_lea.vmem %s3, %s336
      $region56: #{tpu_custom_call.1} parent=47 // pred_fallthru
        _
      // Predicated region
      $region57: #{tpu_custom_call.1} parent=47 // pred_check
        %p338 = pneg %p160
      $region58: #{tpu_custom_call.1} parent=47 // pred_check_branch
        %340 = sbr.rel (%p338) target = $region60
      $region59: #{tpu_custom_call.1} parent=47 // pred_region
        %p341 = scmp.lt.s32.totalorder %s22, 1
        %s342 = scalar_select %p341, %s22, 1
        %s343 = smul.addr %s342, 8
        %s344 = scalar_lea.vmem %s4, %s343
      $region60: #{tpu_custom_call.1} parent=47 // pred_fallthru
        _
    $region48: #{tpu_custom_call.1} parent=5 // pred_fallthru
      _
  $region6: #{tpu_custom_call.1} parent=0 // loop_footer
    %s15 = sadd.s32 1, %s11
  $region7: #{tpu_custom_call.1} parent=0 // loop_footer_branch
    %10 = sbr.rel target = $region3
  $region8: #{tpu_custom_call.1} parent=0 // loop_exit
    _

</llo_original>
